<compile_context>
chip_gen: v7x
topology: tpu7x:2x2x1
jax: 0.10.0
libtpu: 0.0.40
codegen_flags: <defaults>
</compile_context>

<pallas_src>
import functools
import math

import jax
import jax.numpy as jnp
from jax.experimental import pallas as pl
from jax.experimental.pallas import tpu as pltpu

_EPS = 1e-8                                # torch.nn.CosineSimilarity default eps
_VMEM_LIMIT = 32 * 1024 * 1024             # explicit scoped-VMEM limit (safe on v5e/v6e/v7x)
_INPUT_VMEM_BUDGET = 8 * 1024 * 1024       # budget for double-buffered x+y input tiles


# ----------------------------------------------------------------------------
# Tile-size selection helpers
# ----------------------------------------------------------------------------
def _sublane_multiple(itemsize):
    # native second-minor tiling: f32 -> 8, bf16/f16 -> 16, int8/fp8 -> 32
    return {4: 8, 2: 16, 1: 32}.get(itemsize, 8)


def _round_up(v, m):
    return -(-v // m) * m


def _choose_row_tile(M, H, itemsize):
    """Rows per grid step for the row-wise kernel (2 inputs x 2 pipeline buffers)."""
    mult = _sublane_multiple(itemsize)
    per_row = 2 * 2 * H * itemsize
    tm = _INPUT_VMEM_BUDGET // max(per_row, 1)
    tm = max(mult, min(tm, 1024))
    if M >= 256:
        # give the "parallel" row axis >= ~4 steps so both TCs on v7x get work
        tm = min(tm, _round_up(pl.cdiv(M, 4), mult))
    if tm >= M:
        return M                       # single full block: always a legal block shape
    return max(mult, (tm // mult) * mult)
    # TODO(synk): for extremely large H (>~16-32K f32) add a second 'arbitrary'
    # grid axis over H with a VMEM accumulator instead of shrinking TM further.


def _choose_matrix_tiles(A, B, H, isx, isy):
    """(TI, TJ) tiles for the cosine-matrix kernel."""
    ti = A if A <= 256 else 256        # 256 matches v6e/v7x MXU; still fine on v5e
    tj = B if B <= 256 else 256
    # keep double-buffered x/y input tiles under the VMEM budget
    while (2 * 2 * (ti * isx + tj * isy) * H > _INPUT_VMEM_BUDGET
           and (ti > 8 or tj > 128)):
        if ti >= tj and ti > 8:
            ti = max(8, ti // 2)
        elif tj > 128:
            tj = max(128, tj // 2)
        else:
            break
    mult_i = _sublane_multiple(isx)
    if ti < A:                         # tiled -> must respect sublane tiling
        ti = max(mult_i, (ti // mult_i) * mult_i)
    if tj < B:                         # tiled -> output lane dim must be 128-aligned
        tj = max(128, (tj // 128) * 128)
    return ti, tj


# ----------------------------------------------------------------------------
# Kernels
# ----------------------------------------------------------------------------
def _cos_rows_kernel(x_ref, y_ref, o_ref, *, inv_temp):
    # x_ref, y_ref : (TM, H) tiles in their native dtype; o_ref : (TM, 1) f32.
    x = x_ref[...].astype(jnp.float32)
    y = y_ref[...].astype(jnp.float32)
    dot = jnp.sum(x * y, axis=-1, keepdims=True)           # (TM, 1)
    sx = jnp.sum(x * x, axis=-1, keepdims=True)             # (TM, 1)
    sy = jnp.sum(y * y, axis=-1, keepdims=True)             # (TM, 1)
    den2 = jnp.maximum(sx * sy, _EPS * _EPS)                # torch clamps sx*sy by eps^2
    o_ref[...] = dot * jax.lax.rsqrt(den2) * inv_temp       # rsqrt -> EUP slot


def _cos_matrix_kernel(x_ref, y_ref, o_ref, *, inv_temp):
    # x_ref : (TI, H), y_ref : (TJ, H) native dtype; o_ref : (TI, TJ) f32 (lane-dense).
    x = x_ref[...]
    y = y_ref[...]
    if x.dtype != y.dtype:                                   # static promotion
        ct = jnp.promote_types(x.dtype, y.dtype)
        x = x.astype(ct)
        y = y.astype(ct)
    dims = (((1,), (1,)), ((), ()))                          # contract over H (x @ y^T)
    # bf16 operands use the native bf16 MXU path; f32 operands request full-precision
    # contraction so results stay ~f32-exact.
    prec = jax.lax.Precision.HIGHEST if x.dtype == jnp.float32 else None
    dot = jax.lax.dot_general(x, y, dims, precision=prec,
                              preferred_element_type=jnp.float32)        # (TI, TJ)

    xf = x.astype(jnp.float32)
    yf = y.astype(jnp.float32)
    sx = jnp.sum(xf * xf, axis=-1, keepdims=True)                        # (TI, 1)
    # Per-column squared norms, produced directly in lane-indexed (1, TJ) layout via a
    # ones-row matmul (avoids a (TJ,1)->(1,TJ) sublane->lane transpose; MXU is already hot).
    ones = jnp.ones((1, yf.shape[-1]), jnp.float32)
    sy_row = jax.lax.dot_general(ones, yf * yf, dims,
                                 precision=jax.lax.Precision.HIGHEST,
                                 preferred_element_type=jnp.float32)     # (1, TJ)

    den2 = jnp.maximum(sx * sy_row, _EPS * _EPS)                         # (TI, TJ)
    o_ref[...] = dot * jax.lax.rsqrt(den2) * inv_temp


# ----------------------------------------------------------------------------
# Wrappers
# ----------------------------------------------------------------------------
def _as_float(a):
    a = jnp.asarray(a)
    if not jnp.issubdtype(a.dtype, jnp.floating):
        return a.astype(jnp.float32)
    if a.dtype == jnp.float64:
        return a.astype(jnp.float32)
    return a


def _cosine_matrix(xs, ys, inv_temp):
    """cos(x_i, y_j)/temp for xs:(A,H), ys:(B,H)  ->  (A,B), without broadcasting."""
    A, H = xs.shape
    B, _ = ys.shape
    ti, tj = _choose_matrix_tiles(A, B, H, xs.dtype.itemsize, ys.dtype.itemsize)
    grid = (pl.cdiv(A, ti), pl.cdiv(B, tj))

    return pl.pallas_call(
        functools.partial(_cos_matrix_kernel, inv_temp=inv_temp),
        out_shape=jax.ShapeDtypeStruct((A, B), jnp.float32),
        grid=grid,
        in_specs=[
            pl.BlockSpec((ti, H), lambda i, j: (i, 0)),
            pl.BlockSpec((tj, H), lambda i, j: (j, 0)),
        ],
        out_specs=pl.BlockSpec((ti, tj), lambda i, j: (i, j)),
        compiler_params=pltpu.CompilerParams(
            dimension_semantics=("parallel", "parallel"),
            vmem_limit_bytes=_VMEM_LIMIT),
        cost_estimate=pl.CostEstimate(
            flops=int(2 * A * B * H + 2 * (A + B) * H + 4 * A * B),
            transcendentals=int(A * B),
            bytes_accessed=int(A * H * xs.dtype.itemsize * grid[1]
                               + B * H * ys.dtype.itemsize * grid[0]
                               + A * B * 4),
        ),
    )(xs, ys)


def _cosine_rows(x, y, shape, inv_temp):
    """Row-wise cosine over the last dim after (fallback) broadcasting to `shape`."""
    lead, H = shape[:-1], shape[-1]
    M = math.prod(lead) if lead else 1

    # Fallback only: generic broadcasts that are not the SimCSE pattern get materialized.
    if x.shape != shape:
        x = jnp.broadcast_to(x, shape)
    if y.shape != shape:
        y = jnp.broadcast_to(y, shape)
    xf = x.reshape(M, H)
    yf = y.reshape(M, H)

    itemsize = max(xf.dtype.itemsize, yf.dtype.itemsize)
    tm = _choose_row_tile(M, H, itemsize)
    grid = (pl.cdiv(M, tm),)

    out = pl.pallas_call(
        functools.partial(_cos_rows_kernel, inv_temp=inv_temp),
        out_shape=jax.ShapeDtypeStruct((M, 1), jnp.float32),
        grid=grid,
        in_specs=[
            pl.BlockSpec((tm, H), lambda i: (i, 0)),
            pl.BlockSpec((tm, H), lambda i: (i, 0)),
        ],
        out_specs=pl.BlockSpec((tm, 1), lambda i: (i, 0)),
        compiler_params=pltpu.CompilerParams(
            dimension_semantics=("parallel",),
            vmem_limit_bytes=_VMEM_LIMIT),
        cost_estimate=pl.CostEstimate(
            flops=int(8 * M * H),
            transcendentals=int(M),
            bytes_accessed=int(M * H * (xf.dtype.itemsize + yf.dtype.itemsize) + M * 4),
        ),
    )(xf, yf)

    return out[:, 0].reshape(lead)


def similarity_forward(x, y, temp):
    """Pallas implementation of Similarity.forward; `temp` is a static Python float."""
    # TODO(synk): the optional runtime `temp` override in forward() is handled as a static
    # Python float here; a traced temp would need an SMEM scalar input instead.
    x = _as_float(x)
    y = _as_float(y)
    inv_temp = float(1.0 / temp)

    # SimCSE pattern (A,1,H) x (1,B,H): compute the cosine matrix on the MXU without
    # materializing the (A,B,H) broadcast (O(B) less HBM traffic).
    if (x.ndim == 3 and y.ndim == 3
            and x.shape[1] == 1 and y.shape[0] == 1 and x.shape[2] == y.shape[2]):
        A, _, H = x.shape
        B = y.shape[1]
        return _cosine_matrix(x.reshape(A, H), y.reshape(B, H), inv_temp)

    # General case: row-wise cosine over the (broadcast) last dim.
    shape = jnp.broadcast_shapes(x.shape, y.shape)
    return _cosine_rows(x, y, shape, inv_temp)


def reference_forward(x, y, temp):
    """Pure-JAX reference matching torch.nn.CosineSimilarity(dim=-1)(x, y) / temp."""
    shape = jnp.broadcast_shapes(x.shape, y.shape)
    xb = jnp.broadcast_to(x, shape).astype(jnp.float32)
    yb = jnp.broadcast_to(y, shape).astype(jnp.float32)
    dot = jnp.sum(xb * yb, axis=-1)
    denom = jnp.maximum(
        jnp.linalg.norm(xb, axis=-1) * jnp.linalg.norm(yb, axis=-1), _EPS)
    return dot / denom / temp


if __name__ == "__main__":
    key = jax.random.PRNGKey(0)
    kx, ky, ka, kb = jax.random.split(key, 4)
    temp = 0.05

    # 1) Plain same-shape usage: (batch=2, seq=8, hidden=32) -> (2, 8)   [row-wise kernel]
    x = jax.random.normal(kx, (2, 8, 32), jnp.float32)
    y = jax.random.normal(ky, (2, 8, 32), jnp.float32)
    out = jax.block_until_ready(similarity_forward(x, y, temp))
    ref = reference_forward(x, y, temp)
    assert out.shape == (2, 8), out.shape
    assert jnp.allclose(out, ref, atol=1e-4, rtol=1e-4), float(jnp.max(jnp.abs(out - ref)))

    # 2) SimCSE broadcast usage: (4,1,32) x (1,4,32) -> (4,4)            [MXU matrix kernel]
    a = jax.random.normal(ka, (4, 1, 32), jnp.float32)
    b = jax.random.normal(kb, (1, 4, 32), jnp.float32)
    out2 = jax.block_until_ready(similarity_forward(a, b, temp))
    ref2 = reference_forward(a, b, temp)
    assert out2.shape == (4, 4), out2.shape
    assert jnp.allclose(out2, ref2, atol=5e-3, rtol=5e-3), float(jnp.max(jnp.abs(out2 - ref2)))

    # 3) Native-dtype (bf16) DMA path, same-shape                        [row-wise kernel]
    xh, yh = x.astype(jnp.bfloat16), y.astype(jnp.bfloat16)
    out3 = jax.block_until_ready(similarity_forward(xh, yh, temp))
    ref3 = reference_forward(xh, yh, temp)
    assert out3.shape == (2, 8), out3.shape
    assert jnp.allclose(out3, ref3, atol=1e-3, rtol=1e-3), float(jnp.max(jnp.abs(out3 - ref3)))

    # 4) Native-dtype (bf16) SimCSE path                                 [bf16 MXU kernel]
    ah, bh = a.astype(jnp.bfloat16), b.astype(jnp.bfloat16)
    out4 = jax.block_until_ready(similarity_forward(ah, bh, temp))
    ref4 = reference_forward(ah, bh, temp)
    assert out4.shape == (4, 4), out4.shape
    assert jnp.allclose(out4, ref4, atol=5e-3, rtol=5e-3), float(jnp.max(jnp.abs(out4 - ref4)))

    print("KERNEL_OK")
</pallas_src>

<mosaic_0001>
module attributes {stable_mosaic.version = 11 : i64} {
  func.func @_cos_rows_kernel(%arg0: i32, %arg1: memref<16x32xf32, #tpu.memory_space<vmem>>, %arg2: memref<16x32xf32, #tpu.memory_space<vmem>>, %arg3: memref<16x1xf32, #tpu.memory_space<vmem>>) attributes {dimension_semantics = [#tpu.dimension_semantics<parallel>], iteration_bounds = array<i64: 1>, scalar_prefetch = 0 : i64, scratch_operands = 0 : i64, tpu.core_type = #tpu.core_type<tc>, window_params = [{transform_indices = @transform_0, window_bounds = array<i64: 16, 32>}, {transform_indices = @transform_1, window_bounds = array<i64: 16, 32>}, {transform_indices = @transform_2, window_bounds = array<i64: 16, 1>}]} {
    %c0 = arith.constant 0 : index
    %c0_0 = arith.constant 0 : index
    %0 = vector.load %arg1[%c0, %c0_0] : memref<16x32xf32, #tpu.memory_space<vmem>>, vector<16x32xf32>
    %c0_1 = arith.constant 0 : index
    %c0_2 = arith.constant 0 : index
    %1 = vector.load %arg2[%c0_1, %c0_2] : memref<16x32xf32, #tpu.memory_space<vmem>>, vector<16x32xf32>
    %2 = arith.mulf %0, %1 : vector<16x32xf32>
    %cst = arith.constant dense<0.000000e+00> : vector<16xf32>
    %3 = vector.multi_reduction <add>, %2, %cst [1] : vector<16x32xf32> to vector<16xf32>
    %4 = vector.shape_cast %3 : vector<16xf32> to vector<16x1xf32>
    %5 = arith.mulf %0, %0 : vector<16x32xf32>
    %cst_3 = arith.constant dense<0.000000e+00> : vector<16xf32>
    %6 = vector.multi_reduction <add>, %5, %cst_3 [1] : vector<16x32xf32> to vector<16xf32>
    %7 = vector.shape_cast %6 : vector<16xf32> to vector<16x1xf32>
    %8 = arith.mulf %1, %1 : vector<16x32xf32>
    %cst_4 = arith.constant dense<0.000000e+00> : vector<16xf32>
    %9 = vector.multi_reduction <add>, %8, %cst_4 [1] : vector<16x32xf32> to vector<16xf32>
    %10 = vector.shape_cast %9 : vector<16xf32> to vector<16x1xf32>
    %11 = arith.mulf %7, %10 : vector<16x1xf32>
    %cst_5 = arith.constant 1.000000e-16 : f32
    %12 = vector.broadcast %cst_5 : f32 to vector<16x1xf32>
    %13 = arith.maximumf %11, %12 : vector<16x1xf32>
    %14 = math.rsqrt %13 : vector<16x1xf32>
    %15 = arith.mulf %4, %14 : vector<16x1xf32>
    %cst_6 = arith.constant 2.000000e+01 : f32
    %16 = vector.broadcast %cst_6 : f32 to vector<16x1xf32>
    %17 = arith.mulf %15, %16 : vector<16x1xf32>
    %c0_7 = arith.constant 0 : index
    %c0_8 = arith.constant 0 : index
    %18 = vector.load %arg3[%c0_7, %c0_8] : memref<16x1xf32, #tpu.memory_space<vmem>>, vector<16x1xf32>
    tpu.vector_store %arg3[%c0_7, %c0_8], %17 {strides = array<i32>} : memref<16x1xf32, #tpu.memory_space<vmem>>, vector<16x1xf32>,
    return
  }
  func.func @transform_0(%arg0: i32) -> (i32, i32) {
    %c0_i32 = arith.constant 0 : i32
    %c0_i32_0 = arith.constant 0 : i32
    return %arg0, %c0_i32 : i32, i32
  }
  func.func @transform_1(%arg0: i32) -> (i32, i32) {
    %c0_i32 = arith.constant 0 : i32
    %c0_i32_0 = arith.constant 0 : i32
    return %arg0, %c0_i32 : i32, i32
  }
  func.func @transform_2(%arg0: i32) -> (i32, i32) {
    %c0_i32 = arith.constant 0 : i32
    %c0_i32_0 = arith.constant 0 : i32
    return %arg0, %c0_i32 : i32, i32
  }
}

</mosaic_0001>

<llo_original>
// kernel: tpu_custom_call.1
$region0: #{tpu_custom_call.1}
  #allocation0 [shape = 'u32[]', space=smem, size = 0x4, offset = 0x4, fixed_abs, tag = 'smem constant byte address 0x4 - core index']
  #allocation1 [shape = 'u32[144,128]{1,0:T(1,128)}', space=vmem, size = 0x12000, scoped, tag = 'internal scratch']
  %s0 = inlined_call_operand.hbm [shape: f32[16,32], index: 0, kind: input, shape index: {}]
  %s1 = inlined_call_operand.hbm [shape: f32[16,32], index: 1, kind: input, shape index: {}]
  %s2 = inlined_call_operand.vmem [shape: f32[16,1], index: 2, kind: output, shape index: {}]
  %s3 = sld [smem:[#allocation0]]
  $region26: #{tpu_custom_call.1} parent=0
    _
  %s5 = ssub.s32 1, %s3
  %s6 = scalar_select 0, %s5, %s3
  $region1: #{tpu_custom_call.1} parent=0
    #allocation2 [shape = 'u8[8192]{0}', space=vmem, size = 0x2000, scoped, tag = 'input window, operand 0, single buffered']
    #allocation3 [shape = 's32[1]{0}', space=sflag, size = 0x4, scoped, tag = 'scoped memory for tpu_custom_call.1']
    #allocation4 [shape = 'u8[8192]{0}', space=vmem, size = 0x2000, scoped, tag = 'input window, operand 1, single buffered']
    #allocation5 [shape = 's32[1]{0}', space=sflag, size = 0x4, scoped, tag = 'scoped memory for tpu_custom_call.1']
    %7 = vsyncpa [#allocation3], 0
    %8 = vsyncpa [#allocation5], 0
    // Predicated region
    $region2: #{tpu_custom_call.1} parent=1 // pred_check
      _
    $region3: #{tpu_custom_call.1} parent=1 // pred_check_branch
      %10 = sbr.rel (0) target = $region5
    $region4: #{tpu_custom_call.1} parent=1 // pred_region
      %s12 = ssub.s32 256, 256
      %13 = vsyncadd [#allocation3], %s12
      %s14 = sshll.u32 [#allocation2], 4
      %s15 = int_to_ptr.vmem [resolvable:$true] %s14
      %20 = dma.hbm_to_vmem [thread:$0]  %s0, 256, %s15, [#allocation3], 128, 128, 8
    $region5: #{tpu_custom_call.1} parent=1 // pred_fallthru
      _
    // Predicated region
    $region6: #{tpu_custom_call.1} parent=1 // pred_check
      _
    $region7: #{tpu_custom_call.1} parent=1 // pred_check_branch
      %22 = sbr.rel (0) target = $region9
    $region8: #{tpu_custom_call.1} parent=1 // pred_region
      %s24 = ssub.s32 256, 256
      %25 = vsyncadd [#allocation5], %s24
      %s26 = sshll.u32 [#allocation4], 4
      %s27 = int_to_ptr.vmem [resolvable:$true] %s26
      %32 = dma.hbm_to_vmem [thread:$0]  %s1, 256, %s27, [#allocation5], 128, 128, 8
    $region9: #{tpu_custom_call.1} parent=1 // pred_fallthru
      _
    // Predicated region
    $region10: #{tpu_custom_call.1} parent=1 // pred_check
      _
    $region11: #{tpu_custom_call.1} parent=1 // pred_check_branch
      %34 = sbr.rel (0) target = $region13
    $region12: #{tpu_custom_call.1} parent=1 // pred_region
      %35 = dma.done [#allocation3], 256
    $region13: #{tpu_custom_call.1} parent=1 // pred_fallthru
      _
    // Predicated region
    $region14: #{tpu_custom_call.1} parent=1 // pred_check
      _
    $region15: #{tpu_custom_call.1} parent=1 // pred_check_branch
      %37 = sbr.rel (0) target = $region17
    $region16: #{tpu_custom_call.1} parent=1 // pred_region
      %38 = dma.done [#allocation5], 256
    $region17: #{tpu_custom_call.1} parent=1 // pred_fallthru
      _
    %v39 = vld [vmem:[#allocation2] sm:$0xff]
    %v40 = vld [vmem:[#allocation2 + $0x8] sm:$0xff]
    %v41 = vld [vmem:[#allocation4] sm:$0xff]
    %v42 = vld [vmem:[#allocation4 + $0x8] sm:$0xff]
    %v43 = vmul.f32 %v39, %v41
    %v44 = vmul.f32 %v40, %v42
    %vm45 = vcmask 261120
    %v46 = vsel %vm45, %v43, 0.0
    %47 = vadd.xlane.f32.xlu0 %v46
    %v48 = vpop.xlane.xlu0 %47
    %v49 = vsel %vm45, %v44, 0.0
    %50 = vadd.xlane.f32.xlu0 %v49
    %v51 = vpop.xlane.xlu0 %50
    %v52 = vmul.f32 %v39, %v39
    %v53 = vmul.f32 %v40, %v40
    %v54 = vsel %vm45, %v52, 0.0
    %55 = vadd.xlane.f32.xlu0 %v54
    %v56 = vpop.xlane.xlu0 %55
    %v57 = vsel %vm45, %v53, 0.0
    %58 = vadd.xlane.f32.xlu0 %v57
    %v59 = vpop.xlane.xlu0 %58
    %v60 = vmul.f32 %v41, %v41
    %v61 = vmul.f32 %v42, %v42
    %v62 = vsel %vm45, %v60, 0.0
    %63 = vadd.xlane.f32.xlu0 %v62
    %v64 = vpop.xlane.xlu0 %63
    %v65 = vsel %vm45, %v61, 0.0
    %66 = vadd.xlane.f32.xlu0 %v65
    %v67 = vpop.xlane.xlu0 %66
    %v68 = vmul.f32 %v56, %v64
    %v69 = vmul.f32 %v59, %v67
    %v70 = vmax.f32 %v68, 1e-16
    %v71 = vmax.f32 %v69, 1e-16
    %v72 = vrsqrt.pop %v70
    %v73 = vrsqrt.pop %v71
    %v74 = vmul.f32 %v48, %v72
    %v75 = vmul.f32 %v51, %v73
    %v76 = vmul.f32 %v74, 20.0
    %v77 = vmul.f32 %v75, 20.0
    %vm78 = vcmask 7168
    %79 = vst.msk [vmem:[%s2] sm:$0xff] %vm78, %v76
    %80 = vst.msk [vmem:[%s2 + $0x8] sm:$0xff] %vm78, %v77
    // Predicated region
    $region18: #{tpu_custom_call.1} parent=1 // pred_check
      _
    $region19: #{tpu_custom_call.1} parent=1 // pred_check_branch
      %82 = sbr.rel (0) target = $region21
    $region20: #{tpu_custom_call.1} parent=1 // pred_region
      _
    $region21: #{tpu_custom_call.1} parent=1 // pred_fallthru
      _
    // Predicated region
    $region22: #{tpu_custom_call.1} parent=1 // pred_check
      _
    $region23: #{tpu_custom_call.1} parent=1 // pred_check_branch
      %84 = sbr.rel (0) target = $region25
    $region24: #{tpu_custom_call.1} parent=1 // pred_region
      _
    $region25: #{tpu_custom_call.1} parent=1 // pred_fallthru
      _
    %85 = vsyncpa [#allocation3], 1
    %86 = vsyncpa [#allocation5], 1

</llo_original>
